<compile_context>
chip_gen: v5e
topology: v5e:2x2
jax: 0.10.0
libtpu: 0.0.40
codegen_flags: <defaults>
</compile_context>

<pallas_src>
import functools

import jax
import jax.numpy as jnp
import numpy as np
from jax.experimental import pallas as pl
from jax.experimental.pallas import tpu as pltpu

DORDER = 5     # conv2 kernel length along the hidden ("freq") axis
LANE = 128
SUBLANE = 8


def _round_up(v, m):
    return (v + m - 1) // m * m


def tf_fsmn_kernel(*refs, lorder, dilation, skip_connect, pad, pad8):
    if pad > 0:
        x_ref, xh_ref, wl_ref, b_ref, wp_ref, w1_ref, o_ref, pext_ref = refs
    else:
        x_ref, wl_ref, b_ref, wp_ref, w1_ref, o_ref = refs
        xh_ref = pext_ref = None

    t_idx = pl.program_id(1)

    x = x_ref[0]                                  # [t_tile, F_pad] (compute dtype)
    t_tile = x.shape[0]

    wl = wl_ref[...]                              # [F_pad, H_pad]  (freq conv folded in)
    wp = wp_ref[...]                              # [H_pad, D_pad]
    b = b_ref[...]                                # [1, H_pad] f32
    w1 = w1_ref[...]                              # [lorder, D_pad] f32

    # First linear with the 5-tap causal freq conv (+ its residual) pre-folded
    # into the weights: z = x @ (Wl^T M) + (bl M).  bf16 operands, f32 acc.
    z = jnp.dot(x, wl, preferred_element_type=jnp.float32) + b
    a = jnp.maximum(z, 0.0)                       # ReLU; norm == Identity

    # Projection (no bias).
    p = jnp.dot(a.astype(wp.dtype), wp,
                preferred_element_type=jnp.float32)           # [t_tile, D_pad] f32

    acc = p if skip_connect else jnp.zeros_like(p)

    if pad > 0:
        d_pad = p.shape[1]
        # Recompute the causal halo (the pad8 projection rows just before this
        # tile) from the extra x rows, so time tiles stay independent.  For the
        # first tile the halo is the conv's zero padding.
        xh = xh_ref[0]                                            # [pad8, F_pad]
        zh = jnp.dot(xh, wl, preferred_element_type=jnp.float32) + b
        ph = jnp.dot(jnp.maximum(zh, 0.0).astype(wp.dtype), wp,
                     preferred_element_type=jnp.float32)          # [pad8, D_pad]
        ph = jnp.where(t_idx > 0, ph, 0.0)

        # Halo-extended buffer in VMEM; taps are static sublane slices of it.
        pext_ref[0:pad8, :] = ph
        pext_ref[pad8:pad8 + t_tile, :] = p

        # Depthwise causal time conv (conv1, groups=D, dilation along time).
        for k in range(lorder):
            shift = dilation * (lorder - 1 - k)
            if shift == 0:
                tap = p
            else:
                tap = pext_ref[pad8 - shift:pad8 - shift + t_tile, :]
            acc = acc + w1[k:k + 1, :] * tap
    else:
        # lorder == 1: single zero-shift tap, no halo / scratch needed.
        acc = acc + w1[0:1, :] * p

    # Final residual with the (padded) input; padded feature cols of x are zero
    # so padded output cols stay zero and are sliced away in the wrapper.
    o_ref[0] = (x.astype(jnp.float32) + acc).astype(o_ref.dtype)


def make_freq_band_matrix(w2, hidden):
    """Band matrix M s.t. h @ M == causal 5-tap conv over hidden axis + h."""
    i = jnp.arange(hidden)[:, None]
    j = jnp.arange(hidden)[None, :]
    kidx = i - j + (DORDER - 1)                   # z[:, j] += w2[k] * h[:, j-4+k]
    valid = (kidx >= 0) & (kidx <= DORDER - 1)
    band = jnp.where(valid, w2[jnp.clip(kidx, 0, DORDER - 1)], 0.0)
    return band + jnp.eye(hidden, dtype=w2.dtype)  # fold the "+ x" residual


def tf_fsmn(x, Wl, bl, w2, Wp, W1, *, lorder, dilation, skip_connect=True,
            t_tile=None, compute_dtype=jnp.bfloat16, vmem_limit_bytes=None):
    """x: [B,T,F]; Wl: [H,F]; bl: [H]; w2: [5]; Wp: [D,H]; W1: [D,lorder]."""
    B, T, F = x.shape
    H, F_in = Wl.shape
    D, H_in = Wp.shape
    assert F_in == F and H_in == H and W1.shape == (D, lorder)
    # The module always ends with `input + out`, which requires F == D.
    assert F == D, "TFFsmn's final residual requires input_dim == output_dim"

    pad = dilation * (lorder - 1)
    pad8 = _round_up(pad, SUBLANE) if pad > 0 else 0

    # Time tile: multiple of 8 (and of pad8 so the halo is exactly one block of
    # the secondary x view).  Sweep larger values for long sequences.
    if t_tile is None:
        t_tile = min(512, _round_up(T, SUBLANE))
    t_tile = _round_up(max(t_tile, SUBLANE), SUBLANE)
    if pad8 > 0:
        t_tile = _round_up(t_tile, pad8)
    T_pad = _round_up(T, t_tile)

    # Lane-dense feature dims.
    F_pad = _round_up(F, LANE)
    H_pad = _round_up(H, LANE)
    D_pad = F_pad                                  # F == D

    f32 = jnp.float32
    hi = jax.lax.Precision.HIGHEST
    # Fold freq conv (banded matrix + identity residual) into the first linear.
    M = make_freq_band_matrix(w2.astype(f32), H)
    Wl_eff = jnp.dot(Wl.astype(f32).T, M, precision=hi)       # [F, H]
    b_eff = jnp.dot(bl.astype(f32), M, precision=hi)          # [H]

    # Pad to lane/sublane friendly shapes; bf16 for matmul operands only.
    x_p = jnp.pad(x, ((0, 0), (0, T_pad - T), (0, F_pad - F))).astype(compute_dtype)
    wl_p = jnp.pad(Wl_eff, ((0, F_pad - F), (0, H_pad - H))).astype(compute_dtype)
    b_p = jnp.pad(b_eff, ((0, H_pad - H),)).reshape(1, H_pad).astype(f32)
    wp_p = jnp.pad(Wp.astype(f32).T, ((0, H_pad - H), (0, D_pad - D))).astype(compute_dtype)
    w1_p = jnp.pad(W1.astype(f32).T, ((0, 0), (0, D_pad - D)))  # [lorder, D_pad] f32

    kernel = functools.partial(tf_fsmn_kernel, lorder=lorder, dilation=dilation,
                               skip_connect=skip_connect, pad=pad, pad8=pad8)

    # Inputs: x tile, [optional] pad8-row x halo slab, weights (resident).
    in_specs = [pl.BlockSpec((1, t_tile, F_pad), lambda b, t: (b, t, 0))]
    args = [x_p]
    scratch_shapes = []
    if pad > 0:
        rblk = t_tile // pad8     # t's block index measured in pad8-row blocks
        in_specs.append(
            pl.BlockSpec((1, pad8, F_pad),
                         lambda b, t: (b, jnp.maximum(t * rblk - 1, 0), 0)))
        args.append(x_p)
        scratch_shapes.append(pltpu.VMEM((pad8 + t_tile, D_pad), jnp.float32))
    in_specs += [
        pl.BlockSpec((F_pad, H_pad), lambda b, t: (0, 0)),         # Wl_eff
        pl.BlockSpec((1, H_pad), lambda b, t: (0, 0)),             # b_eff
        pl.BlockSpec((H_pad, D_pad), lambda b, t: (0, 0)),         # Wp^T
        pl.BlockSpec((lorder, D_pad), lambda b, t: (0, 0)),        # conv1 weights
    ]
    args += [wl_p, b_p, wp_p, w1_p]

    out = pl.pallas_call(
        kernel,
        out_shape=jax.ShapeDtypeStruct((B, T_pad, D_pad), x.dtype),
        grid_spec=pltpu.PrefetchScalarGridSpec(
            num_scalar_prefetch=0,
            grid=(B, T_pad // t_tile),
            in_specs=in_specs,
            out_specs=pl.BlockSpec((1, t_tile, D_pad), lambda b, t: (b, t, 0)),
            scratch_shapes=scratch_shapes,
        ),
        compiler_params=pltpu.CompilerParams(
            dimension_semantics=("parallel", "parallel"),
            vmem_limit_bytes=vmem_limit_bytes,     # set explicitly for very
                                                   # large tiles if needed
        ),
    )(*args)

    return out[:, :T, :D]


def reference_jax(x, Wl, bl, w2, Wp, W1, *, lorder, dilation, skip_connect=True):
    """Plain-JAX transcription of TFFsmn.compute1 for verification (f32)."""
    B, T, F = x.shape
    H = Wl.shape[0]
    h = x @ Wl.T + bl                                            # [B, T, H]
    hp = jnp.pad(h, ((0, 0), (0, 0), (DORDER - 1, 0)))
    z = sum(w2[k] * hp[:, :, k:k + H] for k in range(DORDER)) + h
    a = jax.nn.relu(z)
    p = a @ Wp.T                                                 # [B, T, D]
    pad = dilation * (lorder - 1)
    pp = jnp.pad(p, ((0, 0), (pad, 0), (0, 0)))
    out = sum(W1[:, k][None, None, :] * pp[:, k * dilation:k * dilation + T, :]
              for k in range(lorder))
    if skip_connect:
        out = out + p
    return x + out


if __name__ == "__main__":
    # Small shapes consistent with the module (input_dim == output_dim required
    # by the final residual; hidden_size may differ).
    B, T = 2, 16
    input_dim = output_dim = 32
    hidden = 64
    lorder, dilation = 4, 2

    key = jax.random.PRNGKey(0)
    kx, k1, k2, k3, k4, k5 = jax.random.split(key, 6)

    x = jax.random.normal(kx, (B, T, input_dim), dtype=jnp.float32)

    # Deterministic synthetic parameters (shapes from TFFsmn.__init__):
    Wl = 0.1 * jax.random.normal(k1, (hidden, input_dim), dtype=jnp.float32)   # linear.weight
    bl = 0.1 * jax.random.normal(k2, (hidden,), dtype=jnp.float32)             # linear.bias
    w2 = 0.1 * jax.random.normal(k3, (DORDER,), dtype=jnp.float32)             # conv2.weight [1,1,5,1]
    Wp = 0.1 * jax.random.normal(k4, (output_dim, hidden), dtype=jnp.float32)  # project.weight
    W1 = 0.1 * jax.random.normal(k5, (output_dim, lorder), dtype=jnp.float32)  # conv1.weight [D,1,L,1]

    ref = reference_jax(x, Wl, bl, w2, Wp, W1,
                        lorder=lorder, dilation=dilation, skip_connect=True)

    # 1) f32 compute path with a small T tile (t_tile=8 < T so the recomputed
    #    halo across time tiles is actually exercised): tight algorithmic check.
    out_f32 = tf_fsmn(x, Wl, bl, w2, Wp, W1, lorder=lorder, dilation=dilation,
                      skip_connect=True, t_tile=8, compute_dtype=jnp.float32)
    out_f32 = jax.block_until_ready(out_f32)
    np.testing.assert_allclose(np.asarray(out_f32), np.asarray(ref),
                               rtol=1e-4, atol=1e-4)

    # 2) bf16 production path (bf16 operands, f32 accumulation): loose sanity
    #    check — operand rounding dominates; the algorithm is validated above.
    out_bf16 = tf_fsmn(x, Wl, bl, w2, Wp, W1, lorder=lorder, dilation=dilation,
                       skip_connect=True, t_tile=8, compute_dtype=jnp.bfloat16)
    out_bf16 = jax.block_until_ready(out_bf16)
    np.testing.assert_allclose(np.asarray(out_bf16), np.asarray(ref),
                               rtol=1e-1, atol=1e-1)

    print("KERNEL_OK")
</pallas_src>

<mosaic_0001>
module attributes {stable_mosaic.version = 11 : i64} {
  func.func @tf_fsmn_kernel(%arg0: i32, %arg1: i32, %arg2: memref<1x8x128xf32, #tpu.memory_space<vmem>>, %arg3: memref<1x8x128xf32, #tpu.memory_space<vmem>>, %arg4: memref<128x128xf32, #tpu.memory_space<vmem>>, %arg5: memref<1x128xf32, #tpu.memory_space<vmem>>, %arg6: memref<128x128xf32, #tpu.memory_space<vmem>>, %arg7: memref<4x128xf32, #tpu.memory_space<vmem>>, %arg8: memref<1x8x128xf32, #tpu.memory_space<vmem>>, %arg9: memref<16x128xf32, #tpu.memory_space<vmem>>) attributes {dimension_semantics = [#tpu.dimension_semantics<parallel>, #tpu.dimension_semantics<parallel>], iteration_bounds = array<i64: 2, 2>, scalar_prefetch = 0 : i64, scratch_operands = 1 : i64, tpu.core_type = #tpu.core_type<tc>, window_params = [{transform_indices = @transform_0, window_bounds = array<i64: 1, 8, 128>}, {transform_indices = @transform_1, window_bounds = array<i64: 1, 8, 128>}, {pipeline_mode = #tpu.pipeline_mode<synchronous>, transform_indices = @transform_2, window_bounds = array<i64: 128, 128>}, {pipeline_mode = #tpu.pipeline_mode<synchronous>, transform_indices = @transform_3, window_bounds = array<i64: 1, 128>}, {pipeline_mode = #tpu.pipeline_mode<synchronous>, transform_indices = @transform_4, window_bounds = array<i64: 128, 128>}, {pipeline_mode = #tpu.pipeline_mode<synchronous>, transform_indices = @transform_5, window_bounds = array<i64: 4, 128>}, {transform_indices = @transform_6, window_bounds = array<i64: 1, 8, 128>}]} {
    %c0 = arith.constant 0 : index
    %c0_0 = arith.constant 0 : index
    %c0_1 = arith.constant 0 : index
    %0 = vector.load %arg2[%c0, %c0_0, %c0_1] : memref<1x8x128xf32, #tpu.memory_space<vmem>>, vector<1x8x128xf32>
    %1 = vector.shape_cast %0 : vector<1x8x128xf32> to vector<8x128xf32>
    %c0_2 = arith.constant 0 : index
    %c0_3 = arith.constant 0 : index
    %2 = vector.load %arg4[%c0_2, %c0_3] : memref<128x128xf32, #tpu.memory_space<vmem>>, vector<128x128xf32>
    %c0_4 = arith.constant 0 : index
    %c0_5 = arith.constant 0 : index
    %3 = vector.load %arg6[%c0_4, %c0_5] : memref<128x128xf32, #tpu.memory_space<vmem>>, vector<128x128xf32>
    %c0_6 = arith.constant 0 : index
    %c0_7 = arith.constant 0 : index
    %4 = vector.load %arg5[%c0_6, %c0_7] : memref<1x128xf32, #tpu.memory_space<vmem>>, vector<1x128xf32>
    %c0_8 = arith.constant 0 : index
    %c0_9 = arith.constant 0 : index
    %5 = vector.load %arg7[%c0_8, %c0_9] : memref<4x128xf32, #tpu.memory_space<vmem>>, vector<4x128xf32>
    %cst = arith.constant dense<0.000000e+00> : vector<8x128xf32>
    %6 = tpu.matmul %1, %2, %cst {dimension_numbers = #tpu.dot_dimension_numbers<[1], [0], [0], [1], [0, 0, 1, 1], [], []>} : vector<8x128xf32>, vector<128x128xf32>, vector<8x128xf32> -> vector<8x128xf32>
    %7 = vector.broadcast %4 : vector<1x128xf32> to vector<8x128xf32>
    %8 = arith.addf %6, %7 : vector<8x128xf32>
    %cst_10 = arith.constant 0.000000e+00 : f32
    %9 = vector.broadcast %cst_10 : f32 to vector<8x128xf32>
    %10 = arith.maximumf %8, %9 : vector<8x128xf32>
    %cst_11 = arith.constant dense<0.000000e+00> : vector<8x128xf32>
    %11 = tpu.matmul %10, %3, %cst_11 {dimension_numbers = #tpu.dot_dimension_numbers<[1], [0], [0], [1], [0, 0, 1, 1], [], []>} : vector<8x128xf32>, vector<128x128xf32>, vector<8x128xf32> -> vector<8x128xf32>
    %c0_12 = arith.constant 0 : index
    %c0_13 = arith.constant 0 : index
    %c0_14 = arith.constant 0 : index
    %12 = vector.load %arg3[%c0_12, %c0_13, %c0_14] : memref<1x8x128xf32, #tpu.memory_space<vmem>>, vector<1x8x128xf32>
    %13 = vector.shape_cast %12 : vector<1x8x128xf32> to vector<8x128xf32>
    %cst_15 = arith.constant dense<0.000000e+00> : vector<8x128xf32>
    %14 = tpu.matmul %13, %2, %cst_15 {dimension_numbers = #tpu.dot_dimension_numbers<[1], [0], [0], [1], [0, 0, 1, 1], [], []>} : vector<8x128xf32>, vector<128x128xf32>, vector<8x128xf32> -> vector<8x128xf32>
    %15 = vector.broadcast %4 : vector<1x128xf32> to vector<8x128xf32>
    %16 = arith.addf %14, %15 : vector<8x128xf32>
    %cst_16 = arith.constant 0.000000e+00 : f32
    %17 = vector.broadcast %cst_16 : f32 to vector<8x128xf32>
    %18 = arith.maximumf %16, %17 : vector<8x128xf32>
    %cst_17 = arith.constant dense<0.000000e+00> : vector<8x128xf32>
    %19 = tpu.matmul %18, %3, %cst_17 {dimension_numbers = #tpu.dot_dimension_numbers<[1], [0], [0], [1], [0, 0, 1, 1], [], []>} : vector<8x128xf32>, vector<128x128xf32>, vector<8x128xf32> -> vector<8x128xf32>
    %c0_i32 = arith.constant 0 : i32
    %20 = arith.cmpi sgt, %arg1, %c0_i32 : i32
    %cst_18 = arith.constant 0.000000e+00 : f32
    %21 = vector.broadcast %cst_18 : f32 to vector<8x128xf32>
    %22 = arith.select %20, %19, %21 : vector<8x128xf32>
    %c0_19 = arith.constant 0 : index
    %c0_20 = arith.constant 0 : index
    %23 = vector.load %arg9[%c0_19, %c0_20] : memref<16x128xf32, #tpu.memory_space<vmem>>, vector<8x128xf32>
    tpu.vector_store %arg9[%c0_19, %c0_20], %22 {strides = array<i32>} : memref<16x128xf32, #tpu.memory_space<vmem>>, vector<8x128xf32>,
    %c8 = arith.constant 8 : index
    %c0_21 = arith.constant 0 : index
    %24 = vector.load %arg9[%c8, %c0_21] : memref<16x128xf32, #tpu.memory_space<vmem>>, vector<8x128xf32>
    tpu.vector_store %arg9[%c8, %c0_21], %11 {strides = array<i32>} : memref<16x128xf32, #tpu.memory_space<vmem>>, vector<8x128xf32>,
    %c2 = arith.constant 2 : index
    %c0_22 = arith.constant 0 : index
    %25 = vector.load %arg9[%c2, %c0_22] : memref<16x128xf32, #tpu.memory_space<vmem>>, vector<8x128xf32>
    %26 = vector.extract_strided_slice %5 {offsets = [0, 0], sizes = [1, 128], strides = [1, 1]} : vector<4x128xf32> to vector<1x128xf32>
    %27 = vector.broadcast %26 : vector<1x128xf32> to vector<8x128xf32>
    %28 = arith.mulf %27, %25 : vector<8x128xf32>
    %29 = arith.addf %11, %28 : vector<8x128xf32>
    %c4 = arith.constant 4 : index
    %c0_23 = arith.constant 0 : index
    %30 = vector.load %arg9[%c4, %c0_23] : memref<16x128xf32, #tpu.memory_space<vmem>>, vector<8x128xf32>
    %31 = vector.extract_strided_slice %5 {offsets = [1, 0], sizes = [1, 128], strides = [1, 1]} : vector<4x128xf32> to vector<1x128xf32>
    %32 = vector.broadcast %31 : vector<1x128xf32> to vector<8x128xf32>
    %33 = arith.mulf %32, %30 : vector<8x128xf32>
    %34 = arith.addf %29, %33 : vector<8x128xf32>
    %c6 = arith.constant 6 : index
    %c0_24 = arith.constant 0 : index
    %35 = vector.load %arg9[%c6, %c0_24] : memref<16x128xf32, #tpu.memory_space<vmem>>, vector<8x128xf32>
    %36 = vector.extract_strided_slice %5 {offsets = [2, 0], sizes = [1, 128], strides = [1, 1]} : vector<4x128xf32> to vector<1x128xf32>
    %37 = vector.broadcast %36 : vector<1x128xf32> to vector<8x128xf32>
    %38 = arith.mulf %37, %35 : vector<8x128xf32>
    %39 = arith.addf %34, %38 : vector<8x128xf32>
    %40 = vector.extract_strided_slice %5 {offsets = [3, 0], sizes = [1, 128], strides = [1, 1]} : vector<4x128xf32> to vector<1x128xf32>
    %41 = vector.broadcast %40 : vector<1x128xf32> to vector<8x128xf32>
    %42 = arith.mulf %41, %11 : vector<8x128xf32>
    %43 = arith.addf %39, %42 : vector<8x128xf32>
    %44 = arith.addf %1, %43 : vector<8x128xf32>
    %c0_25 = arith.constant 0 : index
    %c0_26 = arith.constant 0 : index
    %c0_27 = arith.constant 0 : index
    %45 = vector.load %arg8[%c0_25, %c0_26, %c0_27] : memref<1x8x128xf32, #tpu.memory_space<vmem>>, vector<1x8x128xf32>
    %46 = vector.shape_cast %45 : vector<1x8x128xf32> to vector<8x128xf32>
    %47 = vector.shape_cast %44 : vector<8x128xf32> to vector<1x8x128xf32>
    tpu.vector_store %arg8[%c0_25, %c0_26, %c0_27], %47 {strides = array<i32>} : memref<1x8x128xf32, #tpu.memory_space<vmem>>, vector<1x8x128xf32>,
    return
  }
  func.func @transform_0(%arg0: i32, %arg1: i32) -> (i32, i32, i32) {
    %c0_i32 = arith.constant 0 : i32
    %c0_i32_0 = arith.constant 0 : i32
    return %arg0, %arg1, %c0_i32 : i32, i32, i32
  }
  func.func @transform_1(%arg0: i32, %arg1: i32) -> (i32, i32, i32) {
    %c1_i32 = arith.constant 1 : i32
    %0 = arith.muli %arg1, %c1_i32 : i32
    %c1_i32_0 = arith.constant 1 : i32
    %1 = arith.subi %0, %c1_i32_0 : i32
    %c0_i32 = arith.constant 0 : i32
    %2 = arith.maxsi %1, %c0_i32 : i32
    %c0_i32_1 = arith.constant 0 : i32
    %c0_i32_2 = arith.constant 0 : i32
    return %arg0, %2, %c0_i32_1 : i32, i32, i32
  }
  func.func @transform_2(%arg0: i32, %arg1: i32) -> (i32, i32) {
    %c0_i32 = arith.constant 0 : i32
    %c0_i32_0 = arith.constant 0 : i32
    %c0_i32_1 = arith.constant 0 : i32
    return %c0_i32, %c0_i32_0 : i32, i32
  }
  func.func @transform_3(%arg0: i32, %arg1: i32) -> (i32, i32) {
    %c0_i32 = arith.constant 0 : i32
    %c0_i32_0 = arith.constant 0 : i32
    %c0_i32_1 = arith.constant 0 : i32
    return %c0_i32, %c0_i32_0 : i32, i32
  }
  func.func @transform_4(%arg0: i32, %arg1: i32) -> (i32, i32) {
    %c0_i32 = arith.constant 0 : i32
    %c0_i32_0 = arith.constant 0 : i32
    %c0_i32_1 = arith.constant 0 : i32
    return %c0_i32, %c0_i32_0 : i32, i32
  }
  func.func @transform_5(%arg0: i32, %arg1: i32) -> (i32, i32) {
    %c0_i32 = arith.constant 0 : i32
    %c0_i32_0 = arith.constant 0 : i32
    %c0_i32_1 = arith.constant 0 : i32
    return %c0_i32, %c0_i32_0 : i32, i32
  }
  func.func @transform_6(%arg0: i32, %arg1: i32) -> (i32, i32, i32) {
    %c0_i32 = arith.constant 0 : i32
    %c0_i32_0 = arith.constant 0 : i32
    return %arg0, %arg1, %c0_i32 : i32, i32, i32
  }
}

</mosaic_0001>

<llo_original>
// kernel: tpu_custom_call.1
$region0: #{tpu_custom_call.1}
  #allocation0 [shape = 'u32[]', space=smem, size = 0x4, offset = 0x4, fixed_abs, tag = 'smem constant byte address 0x4 - core index']
  #allocation1 [shape = 'u32[72,128]{1,0:T(1,128)}', space=vmem, size = 0x9000, scoped, tag = 'internal scratch']
  #allocation2 [shape = 'f32[16,128]{1,0:T(8,128)}', space=vmem, size = 0x2000, scoped, tag = 'scratch operand']
  %s0 = inlined_call_operand.hbm [shape: f32[2,16,128], index: 0, kind: input, shape index: {}]
  %s1 = inlined_call_operand.hbm [shape: f32[2,16,128], index: 1, kind: input, shape index: {}]
  %s2 = inlined_call_operand.hbm [shape: f32[128,128], index: 2, kind: input, shape index: {}]
  %s3 = inlined_call_operand.hbm [shape: f32[1,128], index: 3, kind: input, shape index: {}]
  %s4 = inlined_call_operand.hbm [shape: f32[128,128], index: 4, kind: input, shape index: {}]
  %s5 = inlined_call_operand.vmem [shape: f32[4,128], index: 5, kind: input, shape index: {}]
  %s6 = inlined_call_operand.hbm [shape: f32[2,16,128], index: 6, kind: output, shape index: {}]
  %s7 = sld [smem:[#allocation0]]
  $region77: #{tpu_custom_call.1} parent=0
    _
  %s9 = ssub.s32 1, %s7
  %s10 = scalar_select 0, %s9, %s7
  $region1: #{tpu_custom_call.1} parent=0
    #allocation3 [shape = 'u8[8192]{0}', space=vmem, size = 0x2000, scoped, tag = 'input window, operand 0']
    #allocation4 [shape = 's32[2]{0}', space=sflag, size = 0x8, scoped, tag = 'scoped memory for tpu_custom_call.1']
    #allocation5 [shape = 's32[2]{0}', space=sflag, size = 0x8, scoped, tag = 'scoped memory for tpu_custom_call.1']
    #allocation6 [shape = 'u8[8192]{0}', space=vmem, size = 0x2000, scoped, tag = 'input window, operand 1']
    #allocation7 [shape = 's32[2]{0}', space=sflag, size = 0x8, scoped, tag = 'scoped memory for tpu_custom_call.1']
    #allocation8 [shape = 'u8[65536]{0}', space=vmem, size = 0x10000, scoped, tag = 'input window, operand 2, single buffered']
    #allocation9 [shape = 'u8[512]{0}', space=vmem, size = 0x400, scoped, tag = 'input window, operand 3, single buffered']
    #allocation10 [shape = 's32[1]{0}', space=sflag, size = 0x4, scoped, tag = 'scoped memory for tpu_custom_call.1']
    #allocation11 [shape = 'u8[65536]{0}', space=vmem, size = 0x10000, scoped, tag = 'input window, operand 4, single buffered']
    #allocation12 [shape = 'u8[8192]{0}', space=vmem, size = 0x2000, scoped, tag = 'output window, operand 0']
    %11 = vsyncpa [#allocation4], 0
    %s12 = scalar_lea.sflag [#allocation4], 1
    %13 = vsyncpa %s12, 0
    %14 = vsyncpa [#allocation7], 0
    %s15 = scalar_lea.sflag [#allocation7], 1
    %16 = vsyncpa %s15, 0
    %17 = vsyncpa [#allocation10], 0
    %18 = vsyncpa [#allocation5], 0
    %s19 = scalar_lea.sflag [#allocation5], 1
    %20 = vsyncpa %s19, 0
    loop: start=0, step=1, limit=6
    $region2: #{tpu_custom_call.1} parent=1 // loop_pre_header
      _
    $region3: #{tpu_custom_call.1} parent=1 // loop_header
      %s22 = sphi 0, %s26
      %p23 = scmp.ge.s32.totalorder %s22, 6
      %s29 = sphi 0, %s41
      %s30 = sphi 0, %s37
      %s31 = sphi 0, %s29
      %s32 = sphi 0, %s30
      %s33 = sphi 0, %s31
      %s34 = sphi 0, %s32
      %s46 = sphi 0, %s48
      %s49 = sphi 0, %s46
      %s50 = sphi 0, %s49
      %s66 = sphi 0, %s50
      %s80 = sphi 0, %s82
      %s83 = sphi 0, %s80
      %s84 = sphi 0, %s83
      %s100 = sphi 0, %s84
      %s104 = sphi 0, %s104
      %s106 = sphi 0, %s104
      %s107 = sphi 0, %s106
      %s121 = sphi 0, %s107
      %s125 = sphi 0, %s125
      %s127 = sphi 0, %s125
      %s128 = sphi 0, %s127
      %s142 = sphi 0, %s128
      %s146 = sphi 0, %s146
      %s148 = sphi 0, %s146
      %s149 = sphi 0, %s148
      %s163 = sphi 0, %s149
      %s167 = sphi 0, %s167
      %s169 = sphi 0, %s167
      %s170 = sphi 0, %s169
      %s184 = sphi 0, %s170
      %s192 = sphi 0, %s194
      %s195 = sphi 0, %s192
      %s196 = sphi 0, %s195
      %s212 = sphi 0, %s196
    $region4: #{tpu_custom_call.1} parent=1 // loop_header_branch
      %25 = sbr.rel (%p23) target = $region8
    $region5: #{tpu_custom_call.1} parent=1 // loop_body
      %s27 = ssub.s32 %s22, 1
      %s28 = ssub.s32 %s22, 2
      %s35 = sadd.s32 1, %s30
      %p36 = scmp.ge.s32.totalorder %s35, 2
      %s37 = scalar_select %p36, 0, %s35
      %s38 = sadd.s32 1, %s29
      %s39 = scalar_select %p36, %s38, %s29
      %p40 = scmp.ge.s32.totalorder %s39, 2
      %s41 = scalar_select %p40, 0, %s39
      %s42 = ssub.s32 %s29, %s41
      %s43 = ssub.s32 %s30, %s37
      %s44 = sor.u32 %s42, %s43
      %p45 = scmp.eq.s32.totalorder %s44, 0
      %s47 = sadd.s32 %s46, 1
      %s48 = scalar_select %p45, %s46, %s47
      %p51 = pneg %p45
      %p52 = scmp.eq.s32.totalorder %s22, 3
      %p53 = por %p51, %p52
      %p54 = scmp.ne.s32.totalorder %s46, %s49
      %p55 = scmp.eq.s32.totalorder %s22, 0
      %p56 = por %p54, %p55
      %p57 = scmp.ne.s32.totalorder %s46, %s49
      %p58 = scmp.eq.s32.totalorder %s27, 3
      %p59 = por %p57, %p58
      %p60 = scmp.ne.s32.totalorder %s49, %s50
      %p61 = scmp.eq.s32.totalorder %s27, 0
      %p62 = por %p60, %p61
      %p63 = scmp.ne.s32.totalorder %s49, %s50
      %p64 = scmp.eq.s32.totalorder %s28, 3
      %p65 = por %p63, %p64
      %p67 = scmp.ne.s32.totalorder %s50, %s66
      %p68 = scmp.eq.s32.totalorder %s28, 0
      %p69 = por %p67, %p68
      %s70 = ssub.s32 %s30, 1
      %p71 = scmp.gt.s32.totalorder %s70, 0
      %s72 = scalar_select %p71, %s70, 0
      %s73 = ssub.s32 %s37, 1
      %p74 = scmp.gt.s32.totalorder %s73, 0
      %s75 = scalar_select %p74, %s73, 0
      %s76 = ssub.s32 %s29, %s41
      %s77 = ssub.s32 %s72, %s75
      %s78 = sor.u32 %s76, %s77
      %p79 = scmp.eq.s32.totalorder %s78, 0
      %s81 = sadd.s32 %s80, 1
      %s82 = scalar_select %p79, %s80, %s81
      %p85 = pneg %p79
      %p86 = scmp.eq.s32.totalorder %s22, 3
      %p87 = por %p85, %p86
      %p88 = scmp.ne.s32.totalorder %s80, %s83
      %p89 = scmp.eq.s32.totalorder %s22, 0
      %p90 = por %p88, %p89
      %p91 = scmp.ne.s32.totalorder %s80, %s83
      %p92 = scmp.eq.s32.totalorder %s27, 3
      %p93 = por %p91, %p92
      %p94 = scmp.ne.s32.totalorder %s83, %s84
      %p95 = scmp.eq.s32.totalorder %s27, 0
      %p96 = por %p94, %p95
      %p97 = scmp.ne.s32.totalorder %s83, %s84
      %p98 = scmp.eq.s32.totalorder %s28, 3
      %p99 = por %p97, %p98
      %p101 = scmp.ne.s32.totalorder %s84, %s100
      %p102 = scmp.eq.s32.totalorder %s28, 0
      %p103 = por %p101, %p102
      %s105 = sadd.s32 %s104, 1
      %p108 = scmp.eq.s32.totalorder %s22, 3
      %p109 = scmp.ne.s32.totalorder %s104, %s106
      %p110 = scmp.eq.s32.totalorder %s22, 0
      %p111 = por %p109, %p110
      %p112 = scmp.ne.s32.totalorder %s104, %s106
      %p113 = scmp.eq.s32.totalorder %s27, 3
      %p114 = por %p112, %p113
      %p115 = scmp.ne.s32.totalorder %s106, %s107
      %p116 = scmp.eq.s32.totalorder %s27, 0
      %p117 = por %p115, %p116
      %p118 = scmp.ne.s32.totalorder %s106, %s107
      %p119 = scmp.eq.s32.totalorder %s28, 3
      %p120 = por %p118, %p119
      %p122 = scmp.ne.s32.totalorder %s107, %s121
      %p123 = scmp.eq.s32.totalorder %s28, 0
      %p124 = por %p122, %p123
      %s126 = sadd.s32 %s125, 1
      %p129 = scmp.eq.s32.totalorder %s22, 3
      %p130 = scmp.ne.s32.totalorder %s125, %s127
      %p131 = scmp.eq.s32.totalorder %s22, 0
      %p132 = por %p130, %p131
      %p133 = scmp.ne.s32.totalorder %s125, %s127
      %p134 = scmp.eq.s32.totalorder %s27, 3
      %p135 = por %p133, %p134
      %p136 = scmp.ne.s32.totalorder %s127, %s128
      %p137 = scmp.eq.s32.totalorder %s27, 0
      %p138 = por %p136, %p137
      %p139 = scmp.ne.s32.totalorder %s127, %s128
      %p140 = scmp.eq.s32.totalorder %s28, 3
      %p141 = por %p139, %p140
      %p143 = scmp.ne.s32.totalorder %s128, %s142
      %p144 = scmp.eq.s32.totalorder %s28, 0
      %p145 = por %p143, %p144
      %s147 = sadd.s32 %s146, 1
      %p150 = scmp.eq.s32.totalorder %s22, 3
      %p151 = scmp.ne.s32.totalorder %s146, %s148
      %p152 = scmp.eq.s32.totalorder %s22, 0
      %p153 = por %p151, %p152
      %p154 = scmp.ne.s32.totalorder %s146, %s148
      %p155 = scmp.eq.s32.totalorder %s27, 3
      %p156 = por %p154, %p155
      %p157 = scmp.ne.s32.totalorder %s148, %s149
      %p158 = scmp.eq.s32.totalorder %s27, 0
      %p159 = por %p157, %p158
      %p160 = scmp.ne.s32.totalorder %s148, %s149
      %p161 = scmp.eq.s32.totalorder %s28, 3
      %p162 = por %p160, %p161
      %p164 = scmp.ne.s32.totalorder %s149, %s163
      %p165 = scmp.eq.s32.totalorder %s28, 0
      %p166 = por %p164, %p165
      %s168 = sadd.s32 %s167, 1
      %p171 = scmp.eq.s32.totalorder %s22, 3
      %p172 = scmp.ne.s32.totalorder %s167, %s169
      %p173 = scmp.eq.s32.totalorder %s22, 0
      %p174 = por %p172, %p173
      %p175 = scmp.ne.s32.totalorder %s167, %s169
      %p176 = scmp.eq.s32.totalorder %s27, 3
      %p177 = por %p175, %p176
      %p178 = scmp.ne.s32.totalorder %s169, %s170
      %p179 = scmp.eq.s32.totalorder %s27, 0
      %p180 = por %p178, %p179
      %p181 = scmp.ne.s32.totalorder %s169, %s170
      %p182 = scmp.eq.s32.totalorder %s28, 3
      %p183 = por %p181, %p182
      %p185 = scmp.ne.s32.totalorder %s170, %s184
      %p186 = scmp.eq.s32.totalorder %s28, 0
      %p187 = por %p185, %p186
      %s188 = ssub.s32 %s29, %s41
      %s189 = ssub.s32 %s30, %s37
      %s190 = sor.u32 %s188, %s189
      %p191 = scmp.eq.s32.totalorder %s190, 0
      %s193 = sadd.s32 %s192, 1
      %s194 = scalar_select %p191, %s192, %s193
      %p197 = pneg %p191
      %p198 = scmp.eq.s32.totalorder %s22, 3
      %p199 = por %p197, %p198
      %p200 = scmp.ne.s32.totalorder %s192, %s195
      %p201 = scmp.eq.s32.totalorder %s22, 0
      %p202 = por %p200, %p201
      %p203 = scmp.ne.s32.totalorder %s192, %s195
      %p204 = scmp.eq.s32.totalorder %s27, 3
      %p205 = por %p203, %p204
      %p206 = scmp.ne.s32.totalorder %s195, %s196
      %p207 = scmp.eq.s32.totalorder %s27, 0
      %p208 = por %p206, %p207
      %p209 = scmp.ne.s32.totalorder %s195, %s196
      %p210 = scmp.eq.s32.totalorder %s28, 3
      %p211 = por %p209, %p210
      %p213 = scmp.ne.s32.totalorder %s196, %s212
      %p214 = scmp.eq.s32.totalorder %s28, 0
      %p215 = por %p213, %p214
      %p216 = scmp.le.s32.totalorder 1, %s22
      %p217 = scmp.lt.s32.totalorder %s22, 5
      %p218 = pnand %p216, %p217
      %p219 = pneg %p218
      // Predicated region
      $region9: #{tpu_custom_call.1} parent=5 // pred_check
        _
      $region10: #{tpu_custom_call.1} parent=5 // pred_check_branch
        %221 = sbr.rel (%p218) target = $region12
      $region11: #{tpu_custom_call.1} parent=5 // pred_region
        %s222 = ssub.s32 %s22, 1
        // Predicated region
        $region13: #{tpu_custom_call.1} parent=11 // pred_check
          %p223 = pneg %p117
        $region14: #{tpu_custom_call.1} parent=11 // pred_check_branch
          %225 = sbr.rel (%p223) target = $region16
        $region15: #{tpu_custom_call.1} parent=11 // pred_region
          %227 = vsyncadd [#allocation7], 0
          %s228 = sshll.u32 %s2, 4
          %s229 = int_to_ptr.hbm [resolvable:$true] %s228
          %s230 = sshll.u32 [#allocation8], 4
          %s231 = int_to_ptr.vmem [resolvable:$true] %s230
          %236 = dma.hbm_to_vmem [thread:$0]  %s229, 2048, %s231, [#allocation7], 128, 128, 8
        $region16: #{tpu_custom_call.1} parent=11 // pred_fallthru
          _
        // Predicated region
        $region17: #{tpu_custom_call.1} parent=11 // pred_check
          %p237 = pneg %p138
        $region18: #{tpu_custom_call.1} parent=11 // pred_check_branch
          %239 = sbr.rel (%p237) target = $region20
        $region19: #{tpu_custom_call.1} parent=11 // pred_region
          %241 = vsyncadd [#allocation10], 0
          %s243 = sshll.u32 %s3, 4
          %s244 = int_to_ptr.hbm [resolvable:$true] %s243
          %s245 = sshll.u32 [#allocation9], 4
          %s246 = int_to_ptr.vmem [resolvable:$true] %s245
          %248 = dma.hbm_to_vmem [thread:$0]  %s244, 16, %s246, [#allocation10]
        $region20: #{tpu_custom_call.1} parent=11 // pred_fallthru
          _
        // Predicated region
        $region21: #{tpu_custom_call.1} parent=11 // pred_check
          %p249 = pneg %p159
        $region22: #{tpu_custom_call.1} parent=11 // pred_check_branch
          %251 = sbr.rel (%p249) target = $region24
        $region23: #{tpu_custom_call.1} parent=11 // pred_region
          %253 = vsyncadd [#allocation10], 0
          %s254 = sshll.u32 %s4, 4
          %s255 = int_to_ptr.hbm [resolvable:$true] %s254
          %s256 = sshll.u32 [#allocation11], 4
          %s257 = int_to_ptr.vmem [resolvable:$true] %s256
          %262 = dma.hbm_to_vmem [thread:$0]  %s255, 2048, %s257, [#allocation10], 128, 128, 8
        $region24: #{tpu_custom_call.1} parent=11 // pred_fallthru
          _
        // Predicated region
        $region25: #{tpu_custom_call.1} parent=11 // pred_check
          %p263 = pneg %p180
        $region26: #{tpu_custom_call.1} parent=11 // pred_check_branch
          %265 = sbr.rel (%p263) target = $region28
        $region27: #{tpu_custom_call.1} parent=11 // pred_region
          _
        $region28: #{tpu_custom_call.1} parent=11 // pred_fallthru
          _
      $region12: #{tpu_custom_call.1} parent=5 // pred_fallthru
        _
      %p266 = scmp.lt.s32.totalorder %s22, 4
      // Predicated region
      $region29: #{tpu_custom_call.1} parent=5 // pred_check
        %p267 = pneg %p266
      $region30: #{tpu_custom_call.1} parent=5 // pred_check_branch
        %269 = sbr.rel (%p267) target = $region32
      $region31: #{tpu_custom_call.1} parent=5 // pred_region
        // Predicated region
        $region33: #{tpu_custom_call.1} parent=31 // pred_check
          %p270 = pneg %p56
        $region34: #{tpu_custom_call.1} parent=31 // pred_check_branch
          %272 = sbr.rel (%p270) target = $region36
        $region35: #{tpu_custom_call.1} parent=31 // pred_region
          %s273 = sand.u32 %s46, 1
          %s274 = scalar_lea.sflag [#allocation4], %s273
          %s275 = sand.u32 %s46, 1
          %s276 = smul.addr %s275, 8
          %s277 = scalar_lea.vmem [#allocation3], %s276
          %279 = vsyncadd %s274, 0
          %s280 = smul.addr %s29, 2
          %s281 = sadd.s32 %s30, %s280
          %s282 = smul.addr %s281, 8
          %s283 = scalar_lea.hbm %s0, %s282
          %s285 = sshll.u32 %s283, 4
          %s286 = int_to_ptr.hbm [resolvable:$true] %s285
          %s287 = sshll.u32 %s277, 4
          %s288 = int_to_ptr.vmem [resolvable:$true] %s287
          %290 = dma.hbm_to_vmem [thread:$0]  %s286, 128, %s288, %s274
        $region36: #{tpu_custom_call.1} parent=31 // pred_fallthru
          _
        // Predicated region
        $region37: #{tpu_custom_call.1} parent=31 // pred_check
          %p291 = pneg %p90
        $region38: #{tpu_custom_call.1} parent=31 // pred_check_branch
          %293 = sbr.rel (%p291) target = $region40
        $region39: #{tpu_custom_call.1} parent=31 // pred_region
          %s294 = sand.u32 %s22, 1
          %s295 = scalar_lea.sflag [#allocation7], %s294
          %s296 = sand.u32 %s80, 1
          %s297 = smul.addr %s296, 8
          %s298 = scalar_lea.vmem [#allocation6], %s297
          %s299 = ssub.s32 %s30, 1
          %p300 = scmp.gt.s32.totalorder %s299, 0
          %s301 = scalar_select %p300, %s299, 0
          %303 = vsyncadd %s295, 0
          %s304 = smul.addr %s29, 2
          %s305 = sadd.s32 %s301, %s304
          %s306 = smul.addr %s305, 8
          %s307 = scalar_lea.hbm %s1, %s306
          %s309 = sshll.u32 %s307, 4
          %s310 = int_to_ptr.hbm [resolvable:$true] %s309
          %s311 = sshll.u32 %s298, 4
          %s312 = int_to_ptr.vmem [resolvable:$true] %s311
          %314 = dma.hbm_to_vmem [thread:$0]  %s310, 128, %s312, %s295
        $region40: #{tpu_custom_call.1} parent=31 // pred_fallthru
          _
      $region32: #{tpu_custom_call.1} parent=5 // pred_fallthru
        _
      %p315 = scmp.le.s32.totalorder 1, %s22
      %p316 = scmp.lt.s32.totalorder %s22, 5
      %p317 = pnand %p315, %p316
      %p318 = pneg %p317
      // Predicated region
      $region41: #{tpu_custom_call.1} parent=5 // pred_check
        _
      $region42: #{tpu_custom_call.1} parent=5 // pred_check_branch
        %320 = sbr.rel (%p317) target = $region44
      $region43: #{tpu_custom_call.1} parent=5 // pred_region
        %s321 = ssub.s32 %s22, 1
        %s322 = sand.u32 %s49, 1
        %s323 = scalar_lea.sflag [#allocation4], %s322
        %s324 = sand.u32 %s49, 1
        %s325 = smul.addr %s324, 8
        %s326 = scalar_lea.vmem [#allocation3], %s325
        // Predicated region
        $region45: #{tpu_custom_call.1} parent=43 // pred_check
          %p327 = pneg %p62
        $region46: #{tpu_custom_call.1} parent=43 // pred_check_branch
          %329 = sbr.rel (%p327) target = $region48
        $region47: #{tpu_custom_call.1} parent=43 // pred_region
          %331 = dma.done %s323, 128
        $region48: #{tpu_custom_call.1} parent=43 // pred_fallthru
          _
        %s332 = sand.u32 %s27, 1
        %s333 = scalar_lea.sflag [#allocation7], %s332
        %s334 = sand.u32 %s83, 1
        %s335 = smul.addr %s334, 8
        %s336 = scalar_lea.vmem [#allocation6], %s335
        // Predicated region
        $region49: #{tpu_custom_call.1} parent=43 // pred_check
          %p337 = pneg %p96
        $region50: #{tpu_custom_call.1} parent=43 // pred_check_branch
          %339 = sbr.rel (%p337) target = $region52
        $region51: #{tpu_custom_call.1} parent=43 // pred_region
          %341 = dma.done %s333, 128
        $region52: #{tpu_custom_call.1} parent=43 // pred_fallthru
          _
        // Predicated region
        $region53: #{tpu_custom_call.1} parent=43 // pred_check
          %p342 = pneg %p117
        $region54: #{tpu_custom_call.1} parent=43 // pred_check_branch
          %344 = sbr.rel (%p342) target = $region56
        $region55: #{tpu_custom_call.1} parent=43 // pred_region
          %346 = dma.done [#allocation7], 2048
        $region56: #{tpu_custom_call.1} parent=43 // pred_fallthru
          _
        // Predicated region
        $region57: #{tpu_custom_call.1} parent=43 // pred_check
          %p347 = pneg %p138
        $region58: #{tpu_custom_call.1} parent=43 // pred_check_branch
          %349 = sbr.rel (%p347) target = $region60
        $region59: #{tpu_custom_call.1} parent=43 // pred_region
          %351 = dma.done [#allocation10], 16
        $region60: #{tpu_custom_call.1} parent=43 // pred_fallthru
          _
        // Predicated region
        $region61: #{tpu_custom_call.1} parent=43 // pred_check
          %p352 = pneg %p159
        $region62: #{tpu_custom_call.1} parent=43 // pred_check_branch
          %354 = sbr.rel (%p352) target = $region64
        $region63: #{tpu_custom_call.1} parent=43 // pred_region
          %356 = dma.done [#allocation10], 2048
        $region64: #{tpu_custom_call.1} parent=43 // pred_fallthru
          _
        %s357 = sand.u32 %s49, 1
        %s358 = scalar_lea.sflag [#allocation4], %s357
        %s359 = sand.u32 %s49, 1
        %s360 = smul.addr %s359, 8
        %s361 = scalar_lea.vmem [#allocation3], %s360
        %p362 = pneg %p62
        %p363 = pneg %p59
        %s364 = sand.u32 %s27, 1
        %s365 = scalar_lea.sflag [#allocation7], %s364
        %s366 = sand.u32 %s83, 1
        %s367 = smul.addr %s366, 8
        %s368 = scalar_lea.vmem [#allocation6], %s367
        %p369 = pneg %p96
        %p370 = pneg %p93
        %p371 = pneg %p117
        %p372 = pneg %p114
        %p373 = pneg %p138
        %p374 = pneg %p135
        %p375 = pneg %p159
        %p376 = pneg %p156
        %p377 = pneg %p180
        %p378 = pneg %p177
        %p379 = pneg %p208
        %p380 = pneg %p205
        %s381 = sand.u32 %s195, 1
        %s382 = scalar_lea.sflag [#allocation5], %s381
        %s383 = sand.u32 %s195, 1
        %s384 = smul.addr %s383, 8
        %s385 = scalar_lea.vmem [#allocation12], %s384
        %s386 = ssub.s32 %s32, 1
        %p387 = scmp.gt.s32.totalorder %s386, 0
        %s388 = scalar_select %p387, %s386, 0
        %v389 = vld [vmem:[%s326] sm:$0xff]
        %v390 = vld [vmem:[#allocation8] sm:$0xff]
        %v391 = vld [vmem:[#allocation8 + $0x8] sm:$0xff]
        %v392 = vld [vmem:[#allocation8 + $0x10] sm:$0xff]
        %v393 = vld [vmem:[#allocation8 + $0x18] sm:$0xff]
        %v394 = vld [vmem:[#allocation8 + $0x20] sm:$0xff]
        %v395 = vld [vmem:[#allocation8 + $0x28] sm:$0xff]
        %v396 = vld [vmem:[#allocation8 + $0x30] sm:$0xff]
        %v397 = vld [vmem:[#allocation8 + $0x38] sm:$0xff]
        %v398 = vld [vmem:[#allocation8 + $0x40] sm:$0xff]
        %v399 = vld [vmem:[#allocation8 + $0x48] sm:$0xff]
        %v400 = vld [vmem:[#allocation8 + $0x50] sm:$0xff]
        %v401 = vld [vmem:[#allocation8 + $0x58] sm:$0xff]
        %v402 = vld [vmem:[#allocation8 + $0x60] sm:$0xff]
        %v403 = vld [vmem:[#allocation8 + $0x68] sm:$0xff]
        %v404 = vld [vmem:[#allocation8 + $0x70] sm:$0xff]
        %v405 = vld [vmem:[#allocation8 + $0x78] sm:$0xff]
        %v406 = vld [vmem:[#allocation11] sm:$0xff]
        %v407 = vld [vmem:[#allocation11 + $0x8] sm:$0xff]
        %v408 = vld [vmem:[#allocation11 + $0x10] sm:$0xff]
        %v409 = vld [vmem:[#allocation11 + $0x18] sm:$0xff]
        %v410 = vld [vmem:[#allocation11 + $0x20] sm:$0xff]
        %v411 = vld [vmem:[#allocation11 + $0x28] sm:$0xff]
        %v412 = vld [vmem:[#allocation11 + $0x30] sm:$0xff]
        %v413 = vld [vmem:[#allocation11 + $0x38] sm:$0xff]
        %v414 = vld [vmem:[#allocation11 + $0x40] sm:$0xff]
        %v415 = vld [vmem:[#allocation11 + $0x48] sm:$0xff]
        %v416 = vld [vmem:[#allocation11 + $0x50] sm:$0xff]
        %v417 = vld [vmem:[#allocation11 + $0x58] sm:$0xff]
        %v418 = vld [vmem:[#allocation11 + $0x60] sm:$0xff]
        %v419 = vld [vmem:[#allocation11 + $0x68] sm:$0xff]
        %v420 = vld [vmem:[#allocation11 + $0x70] sm:$0xff]
        %v421 = vld [vmem:[#allocation11 + $0x78] sm:$0xff]
        %v422 = vld [vmem:[#allocation9] sm:$0x1]
        %v423 = vld [vmem:[%s5] sm:$0xf]
        %v425 = vperm.slane %v422, 0
        %427 = vmatpush.msra.mxu0 %v405
        %428 = vmatpush.msra.mxu0 %v404
        %429 = vmatpush.msra.mxu0 %v403
        %430 = vmatpush.msra.mxu0 %v402
        %431 = vmatpush.msra.mxu0 %v401
        %432 = vmatpush.msra.mxu0 %v400
        %433 = vmatpush.msra.mxu0 %v399
        %434 = vmatpush.msra.mxu0 %v398
        %435 = vmatpush.msra.mxu0 %v397
        %436 = vmatpush.msra.mxu0 %v396
        %437 = vmatpush.msra.mxu0 %v395
        %438 = vmatpush.msra.mxu0 %v394
        %439 = vmatpush.msra.mxu0 %v393
        %440 = vmatpush.msra.mxu0 %v392
        %441 = vmatpush.msra.mxu0 %v391
        %442 = vmatpush.msra.mxu0 %v390
        %443 = vmatmul.f32.gmra.mxu0 %v389
        %v444 = vpop.f32.mrf.mxu0
        %v445 = vadd.f32 %v425, %v444
        %446 = vdwg.mxu0
        %v447 = vmax.f32 %v445, 0.0
        %448 = vmatpush.msra.mxu0 %v421
        %449 = vmatpush.msra.mxu0 %v420
        %450 = vmatpush.msra.mxu0 %v419
        %451 = vmatpush.msra.mxu0 %v418
        %452 = vmatpush.msra.mxu0 %v417
        %453 = vmatpush.msra.mxu0 %v416
        %454 = vmatpush.msra.mxu0 %v415
        %455 = vmatpush.msra.mxu0 %v414
        %456 = vmatpush.msra.mxu0 %v413
        %457 = vmatpush.msra.mxu0 %v412
        %458 = vmatpush.msra.mxu0 %v411
        %459 = vmatpush.msra.mxu0 %v410
        %460 = vmatpush.msra.mxu0 %v409
        %461 = vmatpush.msra.mxu0 %v408
        %462 = vmatpush.msra.mxu0 %v407
        %463 = vmatpush.msra.mxu0 %v406
        %464 = vmatmul.f32.gmra.mxu0 %v447
        %v465 = vpop.f32.mrf.mxu0
        %v466 = vadd.f32 0.0, %v465
        %467 = vdwg.mxu0
        %v468 = vld [vmem:[%s336] sm:$0xff]
        %469 = vmatpush.msra.mxu0 %v405
        %470 = vmatpush.msra.mxu0 %v404
        %471 = vmatpush.msra.mxu0 %v403
        %472 = vmatpush.msra.mxu0 %v402
        %473 = vmatpush.msra.mxu0 %v401
        %474 = vmatpush.msra.mxu0 %v400
        %475 = vmatpush.msra.mxu0 %v399
        %476 = vmatpush.msra.mxu0 %v398
        %477 = vmatpush.msra.mxu0 %v397
        %478 = vmatpush.msra.mxu0 %v396
        %479 = vmatpush.msra.mxu0 %v395
        %480 = vmatpush.msra.mxu0 %v394
        %481 = vmatpush.msra.mxu0 %v393
        %482 = vmatpush.msra.mxu0 %v392
        %483 = vmatpush.msra.mxu0 %v391
        %484 = vmatpush.msra.mxu0 %v390
        %485 = vmatmul.f32.gmra.mxu0 %v468
        %v486 = vpop.f32.mrf.mxu0
        %v487 = vadd.f32 %v425, %v486
        %488 = vdwg.mxu0
        %v489 = vmax.f32 %v487, 0.0
        %490 = vmatpush.msra.mxu0 %v421
        %491 = vmatpush.msra.mxu0 %v420
        %492 = vmatpush.msra.mxu0 %v419
        %493 = vmatpush.msra.mxu0 %v418
        %494 = vmatpush.msra.mxu0 %v417
        %495 = vmatpush.msra.mxu0 %v416
        %496 = vmatpush.msra.mxu0 %v415
        %497 = vmatpush.msra.mxu0 %v414
        %498 = vmatpush.msra.mxu0 %v413
        %499 = vmatpush.msra.mxu0 %v412
        %500 = vmatpush.msra.mxu0 %v411
        %501 = vmatpush.msra.mxu0 %v410
        %502 = vmatpush.msra.mxu0 %v409
        %503 = vmatpush.msra.mxu0 %v408
        %504 = vmatpush.msra.mxu0 %v407
        %505 = vmatpush.msra.mxu0 %v406
        %506 = vmatmul.f32.gmra.mxu0 %v489
        %v507 = vpop.f32.mrf.mxu0
        %v508 = vadd.f32 0.0, %v507
        %509 = vdwg.mxu0
        %p510 = scmp.gt.s32.totalorder %s32, 0
        %s511 = scalar_select %p510, 1, 0
        %v512 = vstv %s511
        %vm513 = vcmp.eq.s32.totalorder %v512, 1
        %v514 = vsel %vm513, %v508, 0.0
        %515 = vst [vmem:[#allocation2] sm:$0xff] %v514
        %516 = vst [vmem:[#allocation2 + $0x8] sm:$0xff] %v466
        %v517 = vld [vmem:[#allocation2 + $0x2] sm:$0xff]
        %v518 = vperm.slane %v423, 0
        %v519 = vmul.f32 %v518, %v517
        %v520 = vadd.f32 %v466, %v519
        %v521 = vld [vmem:[#allocation2 + $0x4] sm:$0xff]
        %v522 = vperm.slane %v423, 1
        %v523 = vmul.f32 %v522, %v521
        %v524 = vadd.f32 %v520, %v523
        %v525 = vld [vmem:[#allocation2 + $0x6] sm:$0xff]
        %v526 = vperm.slane %v423, 2
        %v527 = vmul.f32 %v526, %v525
        %v528 = vadd.f32 %v524, %v527
        %v529 = vperm.slane %v423, 3
        %v530 = vmul.f32 %v529, %v466
        %v531 = vadd.f32 %v528, %v530
        %v532 = vadd.f32 %v389, %v531
        %533 = vst [vmem:[%s385] sm:$0xff] %v532
        %s534 = sand.u32 %s195, 1
        %s535 = scalar_lea.sflag [#allocation5], %s534
        %s536 = sand.u32 %s195, 1
        %s537 = smul.addr %s536, 8
        %s538 = scalar_lea.vmem [#allocation12], %s537
        // Predicated region
        $region65: #{tpu_custom_call.1} parent=43 // pred_check
          %p539 = pneg %p205
        $region66: #{tpu_custom_call.1} parent=43 // pred_check_branch
          %541 = sbr.rel (%p539) target = $region68
        $region67: #{tpu_custom_call.1} parent=43 // pred_region
          %543 = vsyncadd %s535, 0
          %s544 = smul.addr %s31, 2
          %s545 = sadd.s32 %s32, %s544
          %s546 = smul.addr %s545, 8
          %s547 = scalar_lea.hbm %s6, %s546
          %s549 = sshll.u32 %s538, 4
          %s550 = int_to_ptr.vmem [resolvable:$true] %s549
          %s551 = sshll.u32 %s547, 4
          %s552 = int_to_ptr.hbm [resolvable:$true] %s551
          %554 = dma.vmem_to_hbm [thread:$0]  %s550, 128, %s552, %s535
        $region68: #{tpu_custom_call.1} parent=43 // pred_fallthru
          _
      $region44: #{tpu_custom_call.1} parent=5 // pred_fallthru
        _
      %p555 = scmp.le.s32.totalorder 2, %s22
      // Predicated region
      $region69: #{tpu_custom_call.1} parent=5 // pred_check
        %p556 = pneg %p555
      $region70: #{tpu_custom_call.1} parent=5 // pred_check_branch
        %558 = sbr.rel (%p556) target = $region72
      $region71: #{tpu_custom_call.1} parent=5 // pred_region
        %s559 = ssub.s32 %s22, 2
        // Predicated region
        $region73: #{tpu_custom_call.1} parent=71 // pred_check
          %p560 = pneg %p211
        $region74: #{tpu_custom_call.1} parent=71 // pred_check_branch
          %562 = sbr.rel (%p560) target = $region76
        $region75: #{tpu_custom_call.1} parent=71 // pred_region
          %s563 = sand.u32 %s196, 1
          %s564 = scalar_lea.sflag [#allocation5], %s563
          %s565 = sand.u32 %s196, 1
          %s566 = smul.addr %s565, 8
          %s567 = scalar_lea.vmem [#allocation12], %s566
          %569 = dma.done %s564, 128
        $region76: #{tpu_custom_call.1} parent=71 // pred_fallthru
          _
      $region72: #{tpu_custom_call.1} parent=5 // pred_fallthru
        _
    $region6: #{tpu_custom_call.1} parent=1 // loop_footer
      %s26 = sadd.s32 1, %s22
    $region7: #{tpu_custom_call.1} parent=1 // loop_footer_branch
      %21 = sbr.rel target = $region3
    $region8: #{tpu_custom_call.1} parent=1 // loop_exit
      _
    %570 = vsyncpa [#allocation4], 1
    %s571 = scalar_lea.sflag [#allocation4], 1
    %572 = vsyncpa %s571, 1
    %573 = vsyncpa [#allocation7], 1
    %s574 = scalar_lea.sflag [#allocation7], 1
    %575 = vsyncpa %s574, 1
    %576 = vsyncpa [#allocation10], 1
    %577 = vsyncpa [#allocation5], 1
    %s578 = scalar_lea.sflag [#allocation5], 1
    %579 = vsyncpa %s578, 1

</llo_original>
